<compile_context>
chip_gen: v7x
topology: tpu7x:2x2x1
jax: 0.10.0
libtpu: 0.0.40
codegen_flags: <defaults>
</compile_context>

<pallas_src>
import functools

import jax
import jax.numpy as jnp
from jax.experimental import pallas as pl
from jax.experimental.pallas import tpu as pltpu

ACTION_BIAS = 0.1  # deterministic scalar bias of the synthetic action


def _round_up(x, m):
    return ((x + m - 1) // m) * m


def _softplus(z):
    # Numerically stable softplus using only exp/log (safe Mosaic lowering).
    return jnp.maximum(z, 0.0) + jnp.log(1.0 + jnp.exp(-jnp.abs(z)))


def _choose_tile_rows(M, D, itemsize):
    sub = max(8, 32 // itemsize)  # sublane multiple: 8 f32 / 16 bf16 / 32 int8
    # Per-row VMEM bytes: 2 streams x 2 pipeline buffers, in-kernel bf16 copies
    # (only when inputs are not already bf16), and lane-padded f32 per-row
    # scalar temporaries (matmul outputs, ce, ...).
    per_row = 4 * D * itemsize + (0 if itemsize == 2 else 4 * D) + 4 * 512
    budget = 22 * 1024 * 1024  # keeps the per-step footprint v7x-safe (64 MiB phys)
    tm = max(sub, (budget // per_row) // sub * sub)
    tm = min(tm, 8192)                              # diminishing returns past ~8k rows
    tm = min(tm, _round_up(-(-M // 2), sub))        # >= 2 tiles: feed both v7x TCs
    return min(tm, _round_up(M, sub))


def _ace_kernel(x_ref, t_ref, w_ref, o_ref, *, mb_size, tile_rows, bias):
    i = pl.program_id(0)

    # Streamed (TM, D) tiles; cast to bf16 for the single-pass MXU matvec
    # (no-op when the inputs are already bf16).
    x = x_ref[...].astype(jnp.bfloat16)
    t = t_ref[...].astype(jnp.bfloat16)
    w = w_ref[...]  # (D, 128) bf16, column 0 holds the action weight, rest zero

    # Per-row action pre-activation on the (otherwise idle) MXU, f32 accumulate:
    #   zz[:, 0] = row . w ; columns 1..127 are zero padding.
    zz_in = jnp.dot(x, w, preferred_element_type=jnp.float32)  # (TM, 128)
    zz_tg = jnp.dot(t, w, preferred_element_type=jnp.float32)

    z_in = zz_in[:, 0:1] + bias  # (TM, 1)
    z_tg = zz_tg[:, 0:1] + bias

    # BCE-with-logits identity (exact rewrite of the module's formula):
    #   a_tg*log(sig(z_in)) + (1-a_tg)*log(1-sig(z_in)) = sig(z_tg)*z_in - softplus(z_in)
    # sigmoid via tanh -> 1 EUP pass; stable softplus -> exp+log: 3 EUP passes/row.
    a_tg = 0.5 * jnp.tanh(0.5 * z_tg) + 0.5
    ce = a_tg * z_in - _softplus(z_in)  # (TM, 1)

    # |ce|, mask rows past the true minibatch size (ragged last tile; padded
    # rows may be stale-VMEM garbage -> select, never multiply), tile sum.
    row = i * tile_rows + jax.lax.broadcasted_iota(jnp.int32, (tile_rows, 1), 0)
    partial = jnp.sum(jnp.where(row < mb_size, jnp.abs(ce), 0.0))

    # Aligned lane-dense (8, 128) output block: partial sum at [0, 0], zeros
    # elsewhere (unmasked vst, one tiny DMA per grid step).
    r = jax.lax.broadcasted_iota(jnp.int32, (8, 128), 0)
    c = jax.lax.broadcasted_iota(jnp.int32, (8, 128), 1)
    o_ref[...] = jnp.where((r == 0) & (c == 0), partial, 0.0)


def action_cross_entropy(inp, tgt, weight, *, tile_rows=None):
    """Mean |action cross entropy| over the minibatch.

    inp, tgt: (M, D) float32 or bfloat16 (bf16 preferred: the kernel is
    HBM-bandwidth bound on these two streams).  weight: (D,) action weight.
    """
    M, D = inp.shape
    assert tgt.shape == (M, D) and weight.shape == (D,)
    itemsize = jnp.dtype(inp.dtype).itemsize
    sub = max(8, 32 // itemsize)

    if tile_rows is None:
        TM = _choose_tile_rows(M, D, itemsize)
    else:
        TM = _round_up(min(tile_rows, _round_up(M, sub)), sub)
    num_tiles = -(-M // TM)

    # Action weight in bf16, lane-padded to an aligned (D, 128) MXU RHS.
    w_pad = jnp.zeros((D, 128), jnp.bfloat16).at[:, 0].set(
        weight.astype(jnp.bfloat16))

    per_row = 4 * D * itemsize + (0 if itemsize == 2 else 4 * D) + 4 * 512
    per_step_bytes = TM * per_row + 2 * D * 128 * 2 + 2 * 8 * 128 * 4
    vmem_limit = int(min(max(per_step_bytes + (8 << 20), 32 << 20), 56 << 20))

    cost = pl.CostEstimate(
        flops=int(4 * M * D + 24 * M),
        transcendentals=int(3 * M),
        bytes_accessed=int(2 * M * D * itemsize + D * 256 + num_tiles * 4096),
    )

    kernel = functools.partial(
        _ace_kernel, mb_size=M, tile_rows=TM, bias=ACTION_BIAS)

    partials = pl.pallas_call(
        kernel,
        out_shape=jax.ShapeDtypeStruct((num_tiles * 8, 128), jnp.float32),
        grid=(num_tiles,),
        in_specs=[
            pl.BlockSpec((TM, D), lambda i: (i, 0)),
            pl.BlockSpec((TM, D), lambda i: (i, 0)),
            pl.BlockSpec((D, 128), lambda i: (0, 0)),  # constant -> stays resident
        ],
        out_specs=pl.BlockSpec((8, 128), lambda i: (i, 0)),
        compiler_params=pltpu.CompilerParams(
            dimension_semantics=("parallel",),
            vmem_limit_bytes=vmem_limit,
        ),
        cost_estimate=cost,
    )(inp, tgt, w_pad)

    # Tiny (num_tiles*8, 128) array of per-tile partial sums (mostly zeros).
    return jnp.sum(partials) / M


def _reference(inp, tgt, weight):
    # The synthetic action evaluates its matvec in bf16 with f32 accumulation
    # (identical to the kernel's definition); the CE formula is the module's.
    x = inp.astype(jnp.bfloat16).astype(jnp.float32)
    t = tgt.astype(jnp.bfloat16).astype(jnp.float32)
    w = weight.astype(jnp.bfloat16).astype(jnp.float32)
    z_in = x @ w + ACTION_BIAS
    z_tg = t @ w + ACTION_BIAS
    a_tg = jax.nn.sigmoid(z_tg)
    ce = a_tg * jax.nn.log_sigmoid(z_in) + (1.0 - a_tg) * jax.nn.log_sigmoid(-z_in)
    return jnp.mean(jnp.abs(ce))


if __name__ == "__main__":
    key = jax.random.PRNGKey(0)
    k1, k2, k3 = jax.random.split(key, 3)

    # Small shapes; mb_size deliberately NOT a multiple of the tile so the
    # ragged-last-tile masking path is exercised (auto TM gives 2 tiles here,
    # which also exercises the multi-tile "parallel" grid).
    mb_size, dim = 200, 128
    inp = jax.random.normal(k1, (mb_size, dim), dtype=jnp.float32)
    tgt = jax.random.normal(k2, (mb_size, dim), dtype=jnp.float32)
    weight = 0.05 * jax.random.normal(k3, (dim,), dtype=jnp.float32)

    ref = _reference(inp, tgt, weight)

    # f32 input streams.
    out_f32 = action_cross_entropy(inp, tgt, weight)
    jax.block_until_ready(out_f32)
    assert jnp.allclose(out_f32, ref, rtol=1e-4, atol=1e-6), (out_f32, ref)

    # bf16 input streams (bandwidth-preferred path; the action matvec is bf16
    # either way, so the same reference applies to tight tolerance).
    out_bf16 = action_cross_entropy(
        inp.astype(jnp.bfloat16), tgt.astype(jnp.bfloat16), weight)
    jax.block_until_ready(out_bf16)
    assert jnp.allclose(out_bf16, ref, rtol=1e-4, atol=1e-6), (out_bf16, ref)

    print("KERNEL_OK")
</pallas_src>

<mosaic_0001>
module attributes {stable_mosaic.version = 11 : i64} {
  func.func @_ace_kernel(%arg0: i32, %arg1: memref<104x128xf32, #tpu.memory_space<vmem>>, %arg2: memref<104x128xf32, #tpu.memory_space<vmem>>, %arg3: memref<128x128xbf16, #tpu.memory_space<vmem>>, %arg4: memref<8x128xf32, #tpu.memory_space<vmem>>) attributes {dimension_semantics = [#tpu.dimension_semantics<parallel>], iteration_bounds = array<i64: 2>, scalar_prefetch = 0 : i64, scratch_operands = 0 : i64, tpu.core_type = #tpu.core_type<tc>, window_params = [{transform_indices = @transform_0, window_bounds = array<i64: 104, 128>}, {transform_indices = @transform_1, window_bounds = array<i64: 104, 128>}, {pipeline_mode = #tpu.pipeline_mode<synchronous>, transform_indices = @transform_2, window_bounds = array<i64: 128, 128>}, {transform_indices = @transform_3, window_bounds = array<i64: 8, 128>}]} {
    %c0 = arith.constant 0 : index
    %c0_0 = arith.constant 0 : index
    %0 = vector.load %arg1[%c0, %c0_0] : memref<104x128xf32, #tpu.memory_space<vmem>>, vector<104x128xf32>
    %1 = arith.truncf %0 : vector<104x128xf32> to vector<104x128xbf16>
    %c0_1 = arith.constant 0 : index
    %c0_2 = arith.constant 0 : index
    %2 = vector.load %arg2[%c0_1, %c0_2] : memref<104x128xf32, #tpu.memory_space<vmem>>, vector<104x128xf32>
    %3 = arith.truncf %2 : vector<104x128xf32> to vector<104x128xbf16>
    %c0_3 = arith.constant 0 : index
    %c0_4 = arith.constant 0 : index
    %4 = vector.load %arg3[%c0_3, %c0_4] : memref<128x128xbf16, #tpu.memory_space<vmem>>, vector<128x128xbf16>
    %cst = arith.constant dense<0.000000e+00> : vector<104x128xf32>
    %5 = tpu.matmul %1, %4, %cst {dimension_numbers = #tpu.dot_dimension_numbers<[1], [0], [0], [1], [0, 0, 1, 1], [], []>} : vector<104x128xbf16>, vector<128x128xbf16>, vector<104x128xf32> -> vector<104x128xf32>
    %cst_5 = arith.constant dense<0.000000e+00> : vector<104x128xf32>
    %6 = tpu.matmul %3, %4, %cst_5 {dimension_numbers = #tpu.dot_dimension_numbers<[1], [0], [0], [1], [0, 0, 1, 1], [], []>} : vector<104x128xbf16>, vector<128x128xbf16>, vector<104x128xf32> -> vector<104x128xf32>
    %7 = vector.extract_strided_slice %5 {offsets = [0, 0], sizes = [104, 1], strides = [1, 1]} : vector<104x128xf32> to vector<104x1xf32>
    %cst_6 = arith.constant 1.000000e-01 : f32
    %8 = vector.broadcast %cst_6 : f32 to vector<104x1xf32>
    %9 = arith.addf %7, %8 : vector<104x1xf32>
    %10 = vector.extract_strided_slice %6 {offsets = [0, 0], sizes = [104, 1], strides = [1, 1]} : vector<104x128xf32> to vector<104x1xf32>
    %cst_7 = arith.constant 1.000000e-01 : f32
    %11 = vector.broadcast %cst_7 : f32 to vector<104x1xf32>
    %12 = arith.addf %10, %11 : vector<104x1xf32>
    %cst_8 = arith.constant 5.000000e-01 : f32
    %13 = vector.broadcast %cst_8 : f32 to vector<104x1xf32>
    %14 = arith.mulf %13, %12 : vector<104x1xf32>
    %15 = math.tanh %14 : vector<104x1xf32>
    %cst_9 = arith.constant 5.000000e-01 : f32
    %16 = vector.broadcast %cst_9 : f32 to vector<104x1xf32>
    %17 = arith.mulf %16, %15 : vector<104x1xf32>
    %cst_10 = arith.constant 5.000000e-01 : f32
    %18 = vector.broadcast %cst_10 : f32 to vector<104x1xf32>
    %19 = arith.addf %17, %18 : vector<104x1xf32>
    %20 = arith.mulf %19, %9 : vector<104x1xf32>
    %cst_11 = arith.constant 0.000000e+00 : f32
    %21 = vector.broadcast %cst_11 : f32 to vector<104x1xf32>
    %22 = arith.maximumf %9, %21 : vector<104x1xf32>
    %23 = math.absf %9 : vector<104x1xf32>
    %cst_12 = arith.constant 0.000000e+00 : f32
    %24 = vector.broadcast %cst_12 : f32 to vector<104x1xf32>
    %25 = arith.subf %24, %23 : vector<104x1xf32>
    %26 = math.exp %25 : vector<104x1xf32>
    %cst_13 = arith.constant 1.000000e+00 : f32
    %27 = vector.broadcast %cst_13 : f32 to vector<104x1xf32>
    %28 = arith.addf %27, %26 : vector<104x1xf32>
    %29 = math.log %28 : vector<104x1xf32>
    %30 = arith.addf %22, %29 : vector<104x1xf32>
    %31 = arith.subf %20, %30 : vector<104x1xf32>
    %c104_i32 = arith.constant 104 : i32
    %32 = arith.muli %arg0, %c104_i32 : i32
    %33 = tpu.iota {dimensions = array<i32: 0>} : vector<104x1xi32>
    %34 = vector.broadcast %32 : i32 to vector<104x1xi32>
    %35 = arith.addi %34, %33 : vector<104x1xi32>
    %c200_i32 = arith.constant 200 : i32
    %36 = vector.broadcast %c200_i32 : i32 to vector<104x1xi32>
    %37 = arith.cmpi slt, %35, %36 : vector<104x1xi32>
    %38 = math.absf %31 : vector<104x1xf32>
    %cst_14 = arith.constant 0.000000e+00 : f32
    %39 = vector.broadcast %cst_14 : f32 to vector<104x1xf32>
    %40 = arith.select %37, %38, %39 : vector<104x1xi1>, vector<104x1xf32>
    %41 = vector.shape_cast %40 : vector<104x1xf32> to vector<1x104x1xf32>
    %cst_15 = arith.constant dense<0.000000e+00> : vector<1xf32>
    %42 = vector.multi_reduction <add>, %41, %cst_15 [1, 2] : vector<1x104x1xf32> to vector<1xf32>
    %43 = vector.shape_cast %42 : vector<1xf32> to vector<1x1x1xf32>
    %44 = vector.extract %43[0, 0, 0] : f32 from vector<1x1x1xf32>
    %45 = tpu.iota {dimensions = array<i32: 0>} : vector<8x128xi32>
    %46 = tpu.iota {dimensions = array<i32: 1>} : vector<8x128xi32>
    %c0_i32 = arith.constant 0 : i32
    %47 = vector.broadcast %c0_i32 : i32 to vector<8x128xi32>
    %48 = arith.cmpi eq, %45, %47 : vector<8x128xi32>
    %c0_i32_16 = arith.constant 0 : i32
    %49 = vector.broadcast %c0_i32_16 : i32 to vector<8x128xi32>
    %50 = arith.cmpi eq, %46, %49 : vector<8x128xi32>
    %51 = arith.andi %48, %50 : vector<8x128xi1>
    %cst_17 = arith.constant 0.000000e+00 : f32
    %52 = vector.broadcast %44 : f32 to vector<8x128xf32>
    %53 = vector.broadcast %cst_17 : f32 to vector<8x128xf32>
    %54 = arith.select %51, %52, %53 : vector<8x128xi1>, vector<8x128xf32>
    %c0_18 = arith.constant 0 : index
    %c0_19 = arith.constant 0 : index
    %55 = vector.load %arg4[%c0_18, %c0_19] : memref<8x128xf32, #tpu.memory_space<vmem>>, vector<8x128xf32>
    tpu.vector_store %arg4[%c0_18, %c0_19], %54 {strides = array<i32>} : memref<8x128xf32, #tpu.memory_space<vmem>>, vector<8x128xf32>,
    return
  }
  func.func @transform_0(%arg0: i32) -> (i32, i32) {
    %c0_i32 = arith.constant 0 : i32
    %c0_i32_0 = arith.constant 0 : i32
    return %arg0, %c0_i32 : i32, i32
  }
  func.func @transform_1(%arg0: i32) -> (i32, i32) {
    %c0_i32 = arith.constant 0 : i32
    %c0_i32_0 = arith.constant 0 : i32
    return %arg0, %c0_i32 : i32, i32
  }
  func.func @transform_2(%arg0: i32) -> (i32, i32) {
    %c0_i32 = arith.constant 0 : i32
    %c0_i32_0 = arith.constant 0 : i32
    %c0_i32_1 = arith.constant 0 : i32
    return %c0_i32, %c0_i32_0 : i32, i32
  }
  func.func @transform_3(%arg0: i32) -> (i32, i32) {
    %c0_i32 = arith.constant 0 : i32
    %c0_i32_0 = arith.constant 0 : i32
    return %arg0, %c0_i32 : i32, i32
  }
}

</mosaic_0001>

<llo_original>
// kernel: tpu_custom_call.1
$region0: #{tpu_custom_call.1}
  #allocation0 [shape = 'u32[]', space=smem, size = 0x4, offset = 0x4, fixed_abs, tag = 'smem constant byte address 0x4 - core index']
  #allocation1 [shape = 'u32[144,128]{1,0:T(1,128)}', space=vmem, size = 0x12000, scoped, tag = 'internal scratch']
  %s0 = inlined_call_operand.hbm [shape: f32[200,128], index: 0, kind: input, shape index: {}]
  %s1 = inlined_call_operand.hbm [shape: f32[200,128], index: 1, kind: input, shape index: {}]
  %s2 = inlined_call_operand.hbm [shape: bf16[128,128], index: 2, kind: input, shape index: {}]
  %s3 = inlined_call_operand.hbm [shape: f32[16,128], index: 3, kind: output, shape index: {}]
  %s4 = sld [smem:[#allocation0]]
  $region57: #{tpu_custom_call.1} parent=0
    _
  %s6 = ssub.s32 1, %s4
  %s7 = scalar_select 0, %s6, %s4
  $region1: #{tpu_custom_call.1} parent=0
    #allocation2 [shape = 'u8[106496]{0}', space=vmem, size = 0x1a000, scoped, tag = 'input window, operand 0']
    #allocation3 [shape = 's32[2]{0}', space=sflag, size = 0x8, scoped, tag = 'scoped memory for tpu_custom_call.1']
    #allocation4 [shape = 's32[2]{0}', space=sflag, size = 0x8, scoped, tag = 'scoped memory for tpu_custom_call.1']
    #allocation5 [shape = 'u8[106496]{0}', space=vmem, size = 0x1a000, scoped, tag = 'input window, operand 1']
    #allocation6 [shape = 's32[2]{0}', space=sflag, size = 0x8, scoped, tag = 'scoped memory for tpu_custom_call.1']
    #allocation7 [shape = 'u8[32768]{0}', space=vmem, size = 0x8000, scoped, tag = 'input window, operand 2, single buffered']
    #allocation8 [shape = 'u8[8192]{0}', space=vmem, size = 0x2000, scoped, tag = 'output window, operand 0']
    %8 = vsyncpa [#allocation3], 0
    %s9 = scalar_lea.sflag [#allocation3], 1
    %10 = vsyncpa %s9, 0
    %11 = vsyncpa [#allocation6], 0
    %s12 = scalar_lea.sflag [#allocation6], 1
    %13 = vsyncpa %s12, 0
    %14 = vsyncpa [#allocation4], 0
    %s15 = scalar_lea.sflag [#allocation4], 1
    %16 = vsyncpa %s15, 0
    loop: start=0, step=1, limit=4
    $region2: #{tpu_custom_call.1} parent=1 // loop_pre_header
      _
    $region3: #{tpu_custom_call.1} parent=1 // loop_header
      %s18 = sphi 0, %s22
      %p19 = scmp.ge.s32.totalorder %s18, 4
      %s28 = sphi 0, %s30
      %s31 = sphi 0, %s28
      %s32 = sphi 0, %s31
      %s48 = sphi 0, %s32
      %s54 = sphi 0, %s56
      %s57 = sphi 0, %s54
      %s58 = sphi 0, %s57
      %s74 = sphi 0, %s58
      %s78 = sphi 0, %s78
      %s80 = sphi 0, %s78
      %s81 = sphi 0, %s80
      %s95 = sphi 0, %s81
      %s101 = sphi 0, %s103
      %s104 = sphi 0, %s101
      %s105 = sphi 0, %s104
      %s121 = sphi 0, %s105
    $region4: #{tpu_custom_call.1} parent=1 // loop_header_branch
      %21 = sbr.rel (%p19) target = $region8
    $region5: #{tpu_custom_call.1} parent=1 // loop_body
      %s23 = ssub.s32 %s18, 1
      %s24 = ssub.s32 %s18, 2
      %s25 = sadd.s32 %s18, 1
      %s26 = ssub.s32 %s18, %s25
      %p27 = scmp.eq.s32.totalorder %s26, 0
      %s29 = sadd.s32 %s28, 1
      %s30 = scalar_select %p27, %s28, %s29
      %p33 = pneg %p27
      %p34 = scmp.eq.s32.totalorder %s18, 1
      %p35 = por %p33, %p34
      %p36 = scmp.ne.s32.totalorder %s28, %s31
      %p37 = scmp.eq.s32.totalorder %s18, 0
      %p38 = por %p36, %p37
      %p39 = scmp.ne.s32.totalorder %s28, %s31
      %p40 = scmp.eq.s32.totalorder %s23, 1
      %p41 = por %p39, %p40
      %p42 = scmp.ne.s32.totalorder %s31, %s32
      %p43 = scmp.eq.s32.totalorder %s23, 0
      %p44 = por %p42, %p43
      %p45 = scmp.ne.s32.totalorder %s31, %s32
      %p46 = scmp.eq.s32.totalorder %s24, 1
      %p47 = por %p45, %p46
      %p49 = scmp.ne.s32.totalorder %s32, %s48
      %p50 = scmp.eq.s32.totalorder %s24, 0
      %p51 = por %p49, %p50
      %s52 = ssub.s32 %s18, %s25
      %p53 = scmp.eq.s32.totalorder %s52, 0
      %s55 = sadd.s32 %s54, 1
      %s56 = scalar_select %p53, %s54, %s55
      %p59 = pneg %p53
      %p60 = scmp.eq.s32.totalorder %s18, 1
      %p61 = por %p59, %p60
      %p62 = scmp.ne.s32.totalorder %s54, %s57
      %p63 = scmp.eq.s32.totalorder %s18, 0
      %p64 = por %p62, %p63
      %p65 = scmp.ne.s32.totalorder %s54, %s57
      %p66 = scmp.eq.s32.totalorder %s23, 1
      %p67 = por %p65, %p66
      %p68 = scmp.ne.s32.totalorder %s57, %s58
      %p69 = scmp.eq.s32.totalorder %s23, 0
      %p70 = por %p68, %p69
      %p71 = scmp.ne.s32.totalorder %s57, %s58
      %p72 = scmp.eq.s32.totalorder %s24, 1
      %p73 = por %p71, %p72
      %p75 = scmp.ne.s32.totalorder %s58, %s74
      %p76 = scmp.eq.s32.totalorder %s24, 0
      %p77 = por %p75, %p76
      %s79 = sadd.s32 %s78, 1
      %p82 = scmp.eq.s32.totalorder %s18, 1
      %p83 = scmp.ne.s32.totalorder %s78, %s80
      %p84 = scmp.eq.s32.totalorder %s18, 0
      %p85 = por %p83, %p84
      %p86 = scmp.ne.s32.totalorder %s78, %s80
      %p87 = scmp.eq.s32.totalorder %s23, 1
      %p88 = por %p86, %p87
      %p89 = scmp.ne.s32.totalorder %s80, %s81
      %p90 = scmp.eq.s32.totalorder %s23, 0
      %p91 = por %p89, %p90
      %p92 = scmp.ne.s32.totalorder %s80, %s81
      %p93 = scmp.eq.s32.totalorder %s24, 1
      %p94 = por %p92, %p93
      %p96 = scmp.ne.s32.totalorder %s81, %s95
      %p97 = scmp.eq.s32.totalorder %s24, 0
      %p98 = por %p96, %p97
      %s99 = ssub.s32 %s18, %s25
      %p100 = scmp.eq.s32.totalorder %s99, 0
      %s102 = sadd.s32 %s101, 1
      %s103 = scalar_select %p100, %s101, %s102
      %p106 = pneg %p100
      %p107 = scmp.eq.s32.totalorder %s18, 1
      %p108 = por %p106, %p107
      %p109 = scmp.ne.s32.totalorder %s101, %s104
      %p110 = scmp.eq.s32.totalorder %s18, 0
      %p111 = por %p109, %p110
      %p112 = scmp.ne.s32.totalorder %s101, %s104
      %p113 = scmp.eq.s32.totalorder %s23, 1
      %p114 = por %p112, %p113
      %p115 = scmp.ne.s32.totalorder %s104, %s105
      %p116 = scmp.eq.s32.totalorder %s23, 0
      %p117 = por %p115, %p116
      %p118 = scmp.ne.s32.totalorder %s104, %s105
      %p119 = scmp.eq.s32.totalorder %s24, 1
      %p120 = por %p118, %p119
      %p122 = scmp.ne.s32.totalorder %s105, %s121
      %p123 = scmp.eq.s32.totalorder %s24, 0
      %p124 = por %p122, %p123
      %p125 = scmp.le.s32.totalorder 1, %s18
      %p126 = scmp.lt.s32.totalorder %s18, 3
      %p127 = pnand %p125, %p126
      %p128 = pneg %p127
      // Predicated region
      $region9: #{tpu_custom_call.1} parent=5 // pred_check
        _
      $region10: #{tpu_custom_call.1} parent=5 // pred_check_branch
        %130 = sbr.rel (%p127) target = $region12
      $region11: #{tpu_custom_call.1} parent=5 // pred_region
        %s131 = ssub.s32 %s18, 1
        // Predicated region
        $region13: #{tpu_custom_call.1} parent=11 // pred_check
          %p132 = pneg %p91
        $region14: #{tpu_custom_call.1} parent=11 // pred_check_branch
          %134 = sbr.rel (%p132) target = $region16
        $region15: #{tpu_custom_call.1} parent=11 // pred_region
          %s136 = ssub.s32 1024, 1024
          %137 = vsyncadd [#allocation6], %s136
          %s138 = sshll.u32 [#allocation7], 4
          %s139 = int_to_ptr.vmem [resolvable:$true] %s138
          %144 = dma.hbm_to_vmem [thread:$0]  %s2, 1024, %s139, [#allocation6], 64, 64, 4
        $region16: #{tpu_custom_call.1} parent=11 // pred_fallthru
          _
      $region12: #{tpu_custom_call.1} parent=5 // pred_fallthru
        _
      %p145 = scmp.lt.s32.totalorder %s18, 2
      // Predicated region
      $region17: #{tpu_custom_call.1} parent=5 // pred_check
        %p146 = pneg %p145
      $region18: #{tpu_custom_call.1} parent=5 // pred_check_branch
        %148 = sbr.rel (%p146) target = $region20
      $region19: #{tpu_custom_call.1} parent=5 // pred_region
        // Predicated region
        $region21: #{tpu_custom_call.1} parent=19 // pred_check
          %p149 = pneg %p38
        $region22: #{tpu_custom_call.1} parent=19 // pred_check_branch
          %151 = sbr.rel (%p149) target = $region24
        $region23: #{tpu_custom_call.1} parent=19 // pred_region
          %s152 = sand.u32 %s28, 1
          %s153 = scalar_lea.sflag [#allocation3], %s152
          %s154 = sand.u32 %s28, 1
          %s155 = smul.addr %s154, 104
          %s156 = scalar_lea.vmem [#allocation2], %s155
          %s157 = smul.u32 13, %s18
          %s158 = ssub.s32 25, %s157
          %p159 = scmp.lt.s32.totalorder %s158, 13
          %s160 = scalar_select %p159, %s158, 13
          %s161 = smul.u32 128, %s160
          %s163 = ssub.s32 1664, %s161
          %164 = vsyncadd %s153, %s163
          %p165 = scmp.ne.s32.totalorder 0, %s161
          %s166 = smul.addr %s157, 128
          %s167 = scalar_lea.hbm %s0, %s166
          %s168 = smul.u32 8, %s160
          %s169 = sshll.u32 %s156, 4
          %s170 = int_to_ptr.vmem [resolvable:$true] %s169
          %s171 = sshll.u32 %s168, 4
          %175 = dma.hbm_to_vmem [thread:$0]  (%p165), %s167, %s171, %s170, %s153, 128, 128, 8
        $region24: #{tpu_custom_call.1} parent=19 // pred_fallthru
          _
        // Predicated region
        $region25: #{tpu_custom_call.1} parent=19 // pred_check
          %p176 = pneg %p64
        $region26: #{tpu_custom_call.1} parent=19 // pred_check_branch
          %178 = sbr.rel (%p176) target = $region28
        $region27: #{tpu_custom_call.1} parent=19 // pred_region
          %s179 = sand.u32 %s18, 1
          %s180 = scalar_lea.sflag [#allocation6], %s179
          %s181 = sand.u32 %s54, 1
          %s182 = smul.addr %s181, 104
          %s183 = scalar_lea.vmem [#allocation5], %s182
          %s184 = smul.u32 13, %s18
          %s185 = ssub.s32 25, %s184
          %p186 = scmp.lt.s32.totalorder %s185, 13
          %s187 = scalar_select %p186, %s185, 13
          %s188 = smul.u32 128, %s187
          %s190 = ssub.s32 1664, %s188
          %191 = vsyncadd %s180, %s190
          %p192 = scmp.ne.s32.totalorder 0, %s188
          %s193 = smul.addr %s184, 128
          %s194 = scalar_lea.hbm %s1, %s193
          %s195 = smul.u32 8, %s187
          %s196 = sshll.u32 %s183, 4
          %s197 = int_to_ptr.vmem [resolvable:$true] %s196
          %s198 = sshll.u32 %s195, 4
          %202 = dma.hbm_to_vmem [thread:$0]  (%p192), %s194, %s198, %s197, %s180, 128, 128, 8
        $region28: #{tpu_custom_call.1} parent=19 // pred_fallthru
          _
      $region20: #{tpu_custom_call.1} parent=5 // pred_fallthru
        _
      %p203 = scmp.le.s32.totalorder 1, %s18
      %p204 = scmp.lt.s32.totalorder %s18, 3
      %p205 = pnand %p203, %p204
      %p206 = pneg %p205
      // Predicated region
      $region29: #{tpu_custom_call.1} parent=5 // pred_check
        _
      $region30: #{tpu_custom_call.1} parent=5 // pred_check_branch
        %208 = sbr.rel (%p205) target = $region32
      $region31: #{tpu_custom_call.1} parent=5 // pred_region
        %s209 = ssub.s32 %s18, 1
        %s210 = sand.u32 %s31, 1
        %s211 = scalar_lea.sflag [#allocation3], %s210
        %s212 = sand.u32 %s31, 1
        %s213 = smul.addr %s212, 104
        %s214 = scalar_lea.vmem [#allocation2], %s213
        // Predicated region
        $region33: #{tpu_custom_call.1} parent=31 // pred_check
          %p215 = pneg %p44
        $region34: #{tpu_custom_call.1} parent=31 // pred_check_branch
          %217 = sbr.rel (%p215) target = $region36
        $region35: #{tpu_custom_call.1} parent=31 // pred_region
          %218 = dma.done %s211, 1664
        $region36: #{tpu_custom_call.1} parent=31 // pred_fallthru
          _
        %s219 = sand.u32 %s23, 1
        %s220 = scalar_lea.sflag [#allocation6], %s219
        %s221 = sand.u32 %s57, 1
        %s222 = smul.addr %s221, 104
        %s223 = scalar_lea.vmem [#allocation5], %s222
        // Predicated region
        $region37: #{tpu_custom_call.1} parent=31 // pred_check
          %p224 = pneg %p70
        $region38: #{tpu_custom_call.1} parent=31 // pred_check_branch
          %226 = sbr.rel (%p224) target = $region40
        $region39: #{tpu_custom_call.1} parent=31 // pred_region
          %227 = dma.done %s220, 1664
        $region40: #{tpu_custom_call.1} parent=31 // pred_fallthru
          _
        // Predicated region
        $region41: #{tpu_custom_call.1} parent=31 // pred_check
          %p228 = pneg %p91
        $region42: #{tpu_custom_call.1} parent=31 // pred_check_branch
          %230 = sbr.rel (%p228) target = $region44
        $region43: #{tpu_custom_call.1} parent=31 // pred_region
          %231 = dma.done [#allocation6], 1024
        $region44: #{tpu_custom_call.1} parent=31 // pred_fallthru
          _
        %s232 = sand.u32 %s31, 1
        %s233 = scalar_lea.sflag [#allocation3], %s232
        %s234 = sand.u32 %s31, 1
        %s235 = smul.addr %s234, 104
        %s236 = scalar_lea.vmem [#allocation2], %s235
        %p237 = pneg %p44
        %p238 = pneg %p41
        %s239 = sand.u32 %s23, 1
        %s240 = scalar_lea.sflag [#allocation6], %s239
        %s241 = sand.u32 %s57, 1
        %s242 = smul.addr %s241, 104
        %s243 = scalar_lea.vmem [#allocation5], %s242
        %p244 = pneg %p70
        %p245 = pneg %p67
        %p246 = pneg %p91
        %p247 = pneg %p88
        %p248 = pneg %p117
        %p249 = pneg %p114
        %s250 = sand.u32 %s104, 1
        %s251 = scalar_lea.sflag [#allocation4], %s250
        %s252 = sand.u32 %s104, 1
        %s253 = smul.addr %s252, 8
        %s254 = scalar_lea.vmem [#allocation8], %s253
        %s255 = smul.u32 13, %s23
        %s256 = ssub.s32 25, %s255
        %p257 = scmp.lt.s32.totalorder %s256, 13
        %s258 = scalar_select %p257, %s256, 13
        %s259 = smul.u32 128, %s258
        %s260 = smul.u32 13, %s23
        %s261 = ssub.s32 25, %s260
        %p262 = scmp.lt.s32.totalorder %s261, 13
        %s263 = scalar_select %p262, %s261, 13
        %s264 = smul.u32 128, %s263
        %v266 = vld [vmem:[%s214] sm:$0xff]
        %v267 = vld [vmem:[%s214 + $0x8] sm:$0xff]
        %v268 = vld [vmem:[%s214 + $0x10] sm:$0xff]
        %v269 = vld [vmem:[%s214 + $0x18] sm:$0xff]
        %v270 = vld [vmem:[%s214 + $0x20] sm:$0xff]
        %v271 = vld [vmem:[%s214 + $0x28] sm:$0xff]
        %v272 = vld [vmem:[%s214 + $0x30] sm:$0xff]
        %v273 = vld [vmem:[%s214 + $0x38] sm:$0xff]
        %v274 = vld [vmem:[%s214 + $0x40] sm:$0xff]
        %v275 = vld [vmem:[%s214 + $0x48] sm:$0xff]
        %v276 = vld [vmem:[%s214 + $0x50] sm:$0xff]
        %v277 = vld [vmem:[%s214 + $0x58] sm:$0xff]
        %v278 = vld [vmem:[%s214 + $0x60] sm:$0xff]
        %v279 = vpack.c.bf16 %v267, %v266
        %v280 = vpack.c.bf16 %v269, %v268
        %v281 = vpack.c.bf16 %v271, %v270
        %v282 = vpack.c.bf16 %v273, %v272
        %v283 = vpack.c.bf16 %v275, %v274
        %v284 = vpack.c.bf16 %v277, %v276
        %v285 = vpack.c.bf16 %v278, %v278
        %v286 = vld [vmem:[%s223] sm:$0xff]
        %v287 = vld [vmem:[%s223 + $0x8] sm:$0xff]
        %v288 = vld [vmem:[%s223 + $0x10] sm:$0xff]
        %v289 = vld [vmem:[%s223 + $0x18] sm:$0xff]
        %v290 = vld [vmem:[%s223 + $0x20] sm:$0xff]
        %v291 = vld [vmem:[%s223 + $0x28] sm:$0xff]
        %v292 = vld [vmem:[%s223 + $0x30] sm:$0xff]
        %v293 = vld [vmem:[%s223 + $0x38] sm:$0xff]
        %v294 = vld [vmem:[%s223 + $0x40] sm:$0xff]
        %v295 = vld [vmem:[%s223 + $0x48] sm:$0xff]
        %v296 = vld [vmem:[%s223 + $0x50] sm:$0xff]
        %v297 = vld [vmem:[%s223 + $0x58] sm:$0xff]
        %v298 = vld [vmem:[%s223 + $0x60] sm:$0xff]
        %v299 = vpack.c.bf16 %v287, %v286
        %v300 = vpack.c.bf16 %v289, %v288
        %v301 = vpack.c.bf16 %v291, %v290
        %v302 = vpack.c.bf16 %v293, %v292
        %v303 = vpack.c.bf16 %v295, %v294
        %v304 = vpack.c.bf16 %v297, %v296
        %v305 = vpack.c.bf16 %v298, %v298
        %v306 = vld [vmem:[#allocation7] sm:$0xf]
        %v307 = vld [vmem:[#allocation7 + $0x4] sm:$0xf]
        %v308 = vld [vmem:[#allocation7 + $0x8] sm:$0xf]
        %v309 = vld [vmem:[#allocation7 + $0xc] sm:$0xf]
        %v310 = vld [vmem:[#allocation7 + $0x10] sm:$0xf]
        %v311 = vld [vmem:[#allocation7 + $0x14] sm:$0xf]
        %v312 = vld [vmem:[#allocation7 + $0x18] sm:$0xf]
        %v313 = vld [vmem:[#allocation7 + $0x1c] sm:$0xf]
        %v314 = vld [vmem:[#allocation7 + $0x20] sm:$0xf]
        %v315 = vld [vmem:[#allocation7 + $0x24] sm:$0xf]
        %v316 = vld [vmem:[#allocation7 + $0x28] sm:$0xf]
        %v317 = vld [vmem:[#allocation7 + $0x2c] sm:$0xf]
        %v318 = vld [vmem:[#allocation7 + $0x30] sm:$0xf]
        %v319 = vld [vmem:[#allocation7 + $0x34] sm:$0xf]
        %v320 = vld [vmem:[#allocation7 + $0x38] sm:$0xf]
        %v321 = vld [vmem:[#allocation7 + $0x3c] sm:$0xf]
        %v338 = vunpack.c.l.b16 %v306
        %v339 = vunpack.c.l.b16 %v307
        %v340 = vunpack.c.l.b16 %v308
        %v341 = vunpack.c.l.b16 %v309
        %v342 = vunpack.c.l.b16 %v310
        %v343 = vunpack.c.l.b16 %v311
        %v344 = vunpack.c.l.b16 %v312
        %v345 = vunpack.c.l.b16 %v313
        %v346 = vunpack.c.l.b16 %v314
        %v347 = vunpack.c.l.b16 %v315
        %v348 = vunpack.c.l.b16 %v316
        %v349 = vunpack.c.l.b16 %v317
        %v350 = vunpack.c.l.b16 %v318
        %v351 = vunpack.c.l.b16 %v319
        %v352 = vunpack.c.l.b16 %v320
        %v353 = vunpack.c.l.b16 %v321
        %v354 = vpack.c.b16 %v339, %v338
        %v355 = vpack.c.b16 %v341, %v340
        %v356 = vpack.c.b16 %v343, %v342
        %v357 = vpack.c.b16 %v345, %v344
        %v358 = vpack.c.b16 %v347, %v346
        %v359 = vpack.c.b16 %v349, %v348
        %v360 = vpack.c.b16 %v351, %v350
        %v361 = vpack.c.b16 %v353, %v352
        %370 = vmatprep.subr.bf16.mxu0 0
        %371 = vmatpush1.bf16.msra.mxu0 %v354
        %372 = vmatprep.subr.bf16.mxu0 0
        %373 = vmatpush1.bf16.msra.mxu0 %v355
        %374 = vmatprep.subr.bf16.mxu0 0
        %375 = vmatpush1.bf16.msra.mxu0 %v356
        %376 = vmatprep.subr.bf16.mxu0 0
        %377 = vmatpush1.bf16.msra.mxu0 %v357
        %378 = vmatprep.subr.bf16.mxu0 0
        %379 = vmatpush1.bf16.msra.mxu0 %v358
        %380 = vmatprep.subr.bf16.mxu0 0
        %381 = vmatpush1.bf16.msra.mxu0 %v359
        %382 = vmatprep.subr.bf16.mxu0 0
        %383 = vmatpush1.bf16.msra.mxu0 %v360
        %384 = vmatprep.subr.bf16.mxu0 0
        %385 = vmatpush1.bf16.msra.mxu0 %v361
        %386 = vmatprep.subr.bf16.mxu0 0
        %387 = vmatpush1.bf16.msra.mxu0 0
        %388 = vmatprep.subr.bf16.mxu0 0
        %389 = vmatpush1.bf16.msra.mxu0 0
        %390 = vmatprep.subr.bf16.mxu0 0
        %391 = vmatpush1.bf16.msra.mxu0 0
        %392 = vmatprep.subr.bf16.mxu0 0
        %393 = vmatpush1.bf16.msra.mxu0 0
        %394 = vmatprep.subr.bf16.mxu0 0
        %395 = vmatpush1.bf16.msra.mxu0 0
        %396 = vmatprep.subr.bf16.mxu0 0
        %397 = vmatpush1.bf16.msra.mxu0 0
        %398 = vmatprep.subr.bf16.mxu0 0
        %399 = vmatpush1.bf16.msra.mxu0 0
        %400 = vmatprep.subr.bf16.mxu0 0
        %401 = vmatpush1.bf16.msra.mxu0 0
        %402 = vmatprep.mubr.bf16.mxu0 0
        %403 = vmatmul.mubr.bf16.gmra.mrb[0].mxu0 %v279
        %v404 = vpop.f32.mrb[0].mxu0
        %v405 = vadd.f32 0.0, %v404
        %v406 = vpop.f32.mrb[0].mxu0
        %v407 = vpop.f32.mrb[0].mxu0
        %v408 = vadd.f32 0.0, %v407
        %v409 = vpop.f32.mrb[0].mxu0
        %410 = vmatprep.mubr.bf16.mxu0 0
        %411 = vmatmul.mubr.bf16.gmra.mrb[0].mxu0 %v280
        %v412 = vpop.f32.mrb[0].mxu0
        %v413 = vadd.f32 0.0, %v412
        %v414 = vpop.f32.mrb[0].mxu0
        %v415 = vpop.f32.mrb[0].mxu0
        %v416 = vadd.f32 0.0, %v415
        %v417 = vpop.f32.mrb[0].mxu0
        %418 = vmatprep.mubr.bf16.mxu0 0
        %419 = vmatmul.mubr.bf16.gmra.mrb[0].mxu0 %v281
        %v420 = vpop.f32.mrb[0].mxu0
        %v421 = vadd.f32 0.0, %v420
        %v422 = vpop.f32.mrb[0].mxu0
        %v423 = vpop.f32.mrb[0].mxu0
        %v424 = vadd.f32 0.0, %v423
        %v425 = vpop.f32.mrb[0].mxu0
        %426 = vmatprep.mubr.bf16.mxu0 0
        %427 = vmatmul.mubr.bf16.gmra.mrb[0].mxu0 %v282
        %v428 = vpop.f32.mrb[0].mxu0
        %v429 = vadd.f32 0.0, %v428
        %v430 = vpop.f32.mrb[0].mxu0
        %v431 = vpop.f32.mrb[0].mxu0
        %v432 = vadd.f32 0.0, %v431
        %v433 = vpop.f32.mrb[0].mxu0
        %434 = vmatprep.mubr.bf16.mxu0 0
        %435 = vmatmul.mubr.bf16.gmra.mrb[0].mxu0 %v283
        %v436 = vpop.f32.mrb[0].mxu0
        %v437 = vadd.f32 0.0, %v436
        %v438 = vpop.f32.mrb[0].mxu0
        %v439 = vpop.f32.mrb[0].mxu0
        %v440 = vadd.f32 0.0, %v439
        %v441 = vpop.f32.mrb[0].mxu0
        %442 = vmatprep.mubr.bf16.mxu0 0
        %443 = vmatmul.mubr.bf16.gmra.mrb[0].mxu0 %v284
        %v444 = vpop.f32.mrb[0].mxu0
        %v445 = vadd.f32 0.0, %v444
        %v446 = vpop.f32.mrb[0].mxu0
        %v447 = vpop.f32.mrb[0].mxu0
        %v448 = vadd.f32 0.0, %v447
        %v449 = vpop.f32.mrb[0].mxu0
        %450 = vmatprep.mubr.bf16.mxu0 0
        %451 = vmatmul.mubr.bf16.gmra.mrb[0].mxu0 %v285
        %v452 = vpop.f32.mrb[0].mxu0
        %v453 = vadd.f32 0.0, %v452
        %v454 = vpop.f32.mrb[0].mxu0
        %v455 = vpop.f32.mrb[0].mxu0
        %v456 = vpop.f32.mrb[0].mxu0
        %457 = vdwg.mxu0
        %458 = vmatprep.subr.bf16.mxu0 0
        %459 = vmatpush1.bf16.msra.mxu0 %v354
        %460 = vmatprep.subr.bf16.mxu0 0
        %461 = vmatpush1.bf16.msra.mxu0 %v355
        %462 = vmatprep.subr.bf16.mxu0 0
        %463 = vmatpush1.bf16.msra.mxu0 %v356
        %464 = vmatprep.subr.bf16.mxu0 0
        %465 = vmatpush1.bf16.msra.mxu0 %v357
        %466 = vmatprep.subr.bf16.mxu0 0
        %467 = vmatpush1.bf16.msra.mxu0 %v358
        %468 = vmatprep.subr.bf16.mxu0 0
        %469 = vmatpush1.bf16.msra.mxu0 %v359
        %470 = vmatprep.subr.bf16.mxu0 0
        %471 = vmatpush1.bf16.msra.mxu0 %v360
        %472 = vmatprep.subr.bf16.mxu0 0
        %473 = vmatpush1.bf16.msra.mxu0 %v361
        %474 = vmatprep.subr.bf16.mxu0 0
        %475 = vmatpush1.bf16.msra.mxu0 0
        %476 = vmatprep.subr.bf16.mxu0 0
        %477 = vmatpush1.bf16.msra.mxu0 0
        %478 = vmatprep.subr.bf16.mxu0 0
        %479 = vmatpush1.bf16.msra.mxu0 0
        %480 = vmatprep.subr.bf16.mxu0 0
        %481 = vmatpush1.bf16.msra.mxu0 0
        %482 = vmatprep.subr.bf16.mxu0 0
        %483 = vmatpush1.bf16.msra.mxu0 0
        %484 = vmatprep.subr.bf16.mxu0 0
        %485 = vmatpush1.bf16.msra.mxu0 0
        %486 = vmatprep.subr.bf16.mxu0 0
        %487 = vmatpush1.bf16.msra.mxu0 0
        %488 = vmatprep.subr.bf16.mxu0 0
        %489 = vmatpush1.bf16.msra.mxu0 0
        %490 = vmatprep.mubr.bf16.mxu0 0
        %491 = vmatmul.mubr.bf16.gmra.mrb[0].mxu0 %v299
        %v492 = vpop.f32.mrb[0].mxu0
        %v493 = vadd.f32 0.0, %v492
        %v494 = vpop.f32.mrb[0].mxu0
        %v495 = vpop.f32.mrb[0].mxu0
        %v496 = vadd.f32 0.0, %v495
        %v497 = vpop.f32.mrb[0].mxu0
        %498 = vmatprep.mubr.bf16.mxu0 0
        %499 = vmatmul.mubr.bf16.gmra.mrb[0].mxu0 %v300
        %v500 = vpop.f32.mrb[0].mxu0
        %v501 = vadd.f32 0.0, %v500
        %v502 = vpop.f32.mrb[0].mxu0
        %v503 = vpop.f32.mrb[0].mxu0
        %v504 = vadd.f32 0.0, %v503
        %v505 = vpop.f32.mrb[0].mxu0
        %506 = vmatprep.mubr.bf16.mxu0 0
        %507 = vmatmul.mubr.bf16.gmra.mrb[0].mxu0 %v301
        %v508 = vpop.f32.mrb[0].mxu0
        %v509 = vadd.f32 0.0, %v508
        %v510 = vpop.f32.mrb[0].mxu0
        %v511 = vpop.f32.mrb[0].mxu0
        %v512 = vadd.f32 0.0, %v511
        %v513 = vpop.f32.mrb[0].mxu0
        %514 = vmatprep.mubr.bf16.mxu0 0
        %515 = vmatmul.mubr.bf16.gmra.mrb[0].mxu0 %v302
        %v516 = vpop.f32.mrb[0].mxu0
        %v517 = vadd.f32 0.0, %v516
        %v518 = vpop.f32.mrb[0].mxu0
        %v519 = vpop.f32.mrb[0].mxu0
        %v520 = vadd.f32 0.0, %v519
        %v521 = vpop.f32.mrb[0].mxu0
        %522 = vmatprep.mubr.bf16.mxu0 0
        %523 = vmatmul.mubr.bf16.gmra.mrb[0].mxu0 %v303
        %v524 = vpop.f32.mrb[0].mxu0
        %v525 = vadd.f32 0.0, %v524
        %v526 = vpop.f32.mrb[0].mxu0
        %v527 = vpop.f32.mrb[0].mxu0
        %v528 = vadd.f32 0.0, %v527
        %v529 = vpop.f32.mrb[0].mxu0
        %530 = vmatprep.mubr.bf16.mxu0 0
        %531 = vmatmul.mubr.bf16.gmra.mrb[0].mxu0 %v304
        %v532 = vpop.f32.mrb[0].mxu0
        %v533 = vadd.f32 0.0, %v532
        %v534 = vpop.f32.mrb[0].mxu0
        %v535 = vpop.f32.mrb[0].mxu0
        %v536 = vadd.f32 0.0, %v535
        %v537 = vpop.f32.mrb[0].mxu0
        %538 = vmatprep.mubr.bf16.mxu0 0
        %539 = vmatmul.mubr.bf16.gmra.mrb[0].mxu0 %v305
        %v540 = vpop.f32.mrb[0].mxu0
        %v541 = vadd.f32 0.0, %v540
        %v542 = vpop.f32.mrb[0].mxu0
        %v543 = vpop.f32.mrb[0].mxu0
        %v544 = vpop.f32.mrb[0].mxu0
        %545 = vdwg.mxu0
        %v546 = vadd.f32 %v405, 0.1
        %v547 = vadd.f32 %v408, 0.1
        %v548 = vadd.f32 %v413, 0.1
        %v549 = vadd.f32 %v416, 0.1
        %v550 = vadd.f32 %v421, 0.1
        %v551 = vadd.f32 %v424, 0.1
        %v552 = vadd.f32 %v429, 0.1
        %v553 = vadd.f32 %v432, 0.1
        %v554 = vadd.f32 %v437, 0.1
        %v555 = vadd.f32 %v440, 0.1
        %v556 = vadd.f32 %v445, 0.1
        %v557 = vadd.f32 %v448, 0.1
        %v558 = vadd.f32 %v453, 0.1
        %v559 = vadd.f32 %v493, 0.1
        %v560 = vadd.f32 %v496, 0.1
        %v561 = vadd.f32 %v501, 0.1
        %v562 = vadd.f32 %v504, 0.1
        %v563 = vadd.f32 %v509, 0.1
        %v564 = vadd.f32 %v512, 0.1
        %v565 = vadd.f32 %v517, 0.1
        %v566 = vadd.f32 %v520, 0.1
        %v567 = vadd.f32 %v525, 0.1
        %v568 = vadd.f32 %v528, 0.1
        %v569 = vadd.f32 %v533, 0.1
        %v570 = vadd.f32 %v536, 0.1
        %v571 = vadd.f32 %v541, 0.1
        %v572 = vmul.f32 %v559, 0.5
        %v573 = vmul.f32 %v560, 0.5
        %v574 = vmul.f32 %v561, 0.5
        %v575 = vmul.f32 %v562, 0.5
        %v576 = vmul.f32 %v563, 0.5
        %v577 = vmul.f32 %v564, 0.5
        %v578 = vmul.f32 %v565, 0.5
        %v579 = vmul.f32 %v566, 0.5
        %v580 = vmul.f32 %v567, 0.5
        %v581 = vmul.f32 %v568, 0.5
        %v582 = vmul.f32 %v569, 0.5
        %v583 = vmul.f32 %v570, 0.5
        %v584 = vmul.f32 %v571, 0.5
        %v585 = vtanh.pop %v572
        %v586 = vtanh.pop %v573
        %v587 = vtanh.pop %v574
        %v588 = vtanh.pop %v575
        %v589 = vtanh.pop %v576
        %v590 = vtanh.pop %v577
        %v591 = vtanh.pop %v578
        %v592 = vtanh.pop %v579
        %v593 = vtanh.pop %v580
        %v594 = vtanh.pop %v581
        %v595 = vtanh.pop %v582
        %v596 = vtanh.pop %v583
        %v597 = vtanh.pop %v584
        %v598 = vmul.f32 %v585, 0.5
        %v599 = vmul.f32 %v586, 0.5
        %v600 = vmul.f32 %v587, 0.5
        %v601 = vmul.f32 %v588, 0.5
        %v602 = vmul.f32 %v589, 0.5
        %v603 = vmul.f32 %v590, 0.5
        %v604 = vmul.f32 %v591, 0.5
        %v605 = vmul.f32 %v592, 0.5
        %v606 = vmul.f32 %v593, 0.5
        %v607 = vmul.f32 %v594, 0.5
        %v608 = vmul.f32 %v595, 0.5
        %v609 = vmul.f32 %v596, 0.5
        %v610 = vmul.f32 %v597, 0.5
        %v611 = vadd.f32 %v598, 0.5
        %v612 = vadd.f32 %v599, 0.5
        %v613 = vadd.f32 %v600, 0.5
        %v614 = vadd.f32 %v601, 0.5
        %v615 = vadd.f32 %v602, 0.5
        %v616 = vadd.f32 %v603, 0.5
        %v617 = vadd.f32 %v604, 0.5
        %v618 = vadd.f32 %v605, 0.5
        %v619 = vadd.f32 %v606, 0.5
        %v620 = vadd.f32 %v607, 0.5
        %v621 = vadd.f32 %v608, 0.5
        %v622 = vadd.f32 %v609, 0.5
        %v623 = vadd.f32 %v610, 0.5
        %v624 = vmul.f32 %v611, %v546
        %v625 = vmul.f32 %v612, %v547
        %v626 = vmul.f32 %v613, %v548
        %v627 = vmul.f32 %v614, %v549
        %v628 = vmul.f32 %v615, %v550
        %v629 = vmul.f32 %v616, %v551
        %v630 = vmul.f32 %v617, %v552
        %v631 = vmul.f32 %v618, %v553
        %v632 = vmul.f32 %v619, %v554
        %v633 = vmul.f32 %v620, %v555
        %v634 = vmul.f32 %v621, %v556
        %v635 = vmul.f32 %v622, %v557
        %v636 = vmul.f32 %v623, %v558
        %v637 = vmax.f32 %v546, 0.0
        %v638 = vmax.f32 %v547, 0.0
        %v639 = vmax.f32 %v548, 0.0
        %v640 = vmax.f32 %v549, 0.0
        %v641 = vmax.f32 %v550, 0.0
        %v642 = vmax.f32 %v551, 0.0
        %v643 = vmax.f32 %v552, 0.0
        %v644 = vmax.f32 %v553, 0.0
        %v645 = vmax.f32 %v554, 0.0
        %v646 = vmax.f32 %v555, 0.0
        %v647 = vmax.f32 %v556, 0.0
        %v648 = vmax.f32 %v557, 0.0
        %v649 = vmax.f32 %v558, 0.0
        %v650 = vand.u32 2147483647, %v546
        %v651 = vand.u32 2147483647, %v547
        %v652 = vand.u32 2147483647, %v548
        %v653 = vand.u32 2147483647, %v549
        %v654 = vand.u32 2147483647, %v550
        %v655 = vand.u32 2147483647, %v551
        %v656 = vand.u32 2147483647, %v552
        %v657 = vand.u32 2147483647, %v553
        %v658 = vand.u32 2147483647, %v554
        %v659 = vand.u32 2147483647, %v555
        %v660 = vand.u32 2147483647, %v556
        %v661 = vand.u32 2147483647, %v557
        %v662 = vand.u32 2147483647, %v558
        %v663 = vsub.f32 0.0, %v650
        %v664 = vsub.f32 0.0, %v651
        %v665 = vsub.f32 0.0, %v652
        %v666 = vsub.f32 0.0, %v653
        %v667 = vsub.f32 0.0, %v654
        %v668 = vsub.f32 0.0, %v655
        %v669 = vsub.f32 0.0, %v656
        %v670 = vsub.f32 0.0, %v657
        %v671 = vsub.f32 0.0, %v658
        %v672 = vsub.f32 0.0, %v659
        %v673 = vsub.f32 0.0, %v660
        %v674 = vsub.f32 0.0, %v661
        %v675 = vsub.f32 0.0, %v662
        %v676 = vmul.f32 %v663, 1.442695
        %v677 = vpow.pop %v676
        %v678 = vmul.f32 %v664, 1.442695
        %v679 = vpow.pop %v678
        %v680 = vmul.f32 %v665, 1.442695
        %v681 = vpow.pop %v680
        %v682 = vmul.f32 %v666, 1.442695
        %v683 = vpow.pop %v682
        %v684 = vmul.f32 %v667, 1.442695
        %v685 = vpow.pop %v684
        %v686 = vmul.f32 %v668, 1.442695
        %v687 = vpow.pop %v686
        %v688 = vmul.f32 %v669, 1.442695
        %v689 = vpow.pop %v688
        %v690 = vmul.f32 %v670, 1.442695
        %v691 = vpow.pop %v690
        %v692 = vmul.f32 %v671, 1.442695
        %v693 = vpow.pop %v692
        %v694 = vmul.f32 %v672, 1.442695
        %v695 = vpow.pop %v694
        %v696 = vmul.f32 %v673, 1.442695
        %v697 = vpow.pop %v696
        %v698 = vmul.f32 %v674, 1.442695
        %v699 = vpow.pop %v698
        %v700 = vmul.f32 %v675, 1.442695
        %v701 = vpow.pop %v700
        %v702 = vadd.f32 %v677, 1.0
        %v703 = vadd.f32 %v679, 1.0
        %v704 = vadd.f32 %v681, 1.0
        %v705 = vadd.f32 %v683, 1.0
        %v706 = vadd.f32 %v685, 1.0
        %v707 = vadd.f32 %v687, 1.0
        %v708 = vadd.f32 %v689, 1.0
        %v709 = vadd.f32 %v691, 1.0
        %v710 = vadd.f32 %v693, 1.0
        %v711 = vadd.f32 %v695, 1.0
        %v712 = vadd.f32 %v697, 1.0
        %v713 = vadd.f32 %v699, 1.0
        %v714 = vadd.f32 %v701, 1.0
        %v715 = vlog2.pop %v702
        %v716 = vmul.f32 %v715, 0.6931472
        %v717 = vlog2.pop %v703
        %v718 = vmul.f32 %v717, 0.6931472
        %v719 = vlog2.pop %v704
        %v720 = vmul.f32 %v719, 0.6931472
        %v721 = vlog2.pop %v705
        %v722 = vmul.f32 %v721, 0.6931472
        %v723 = vlog2.pop %v706
        %v724 = vmul.f32 %v723, 0.6931472
        %v725 = vlog2.pop %v707
        %v726 = vmul.f32 %v725, 0.6931472
        %v727 = vlog2.pop %v708
        %v728 = vmul.f32 %v727, 0.6931472
        %v729 = vlog2.pop %v709
        %v730 = vmul.f32 %v729, 0.6931472
        %v731 = vlog2.pop %v710
        %v732 = vmul.f32 %v731, 0.6931472
        %v733 = vlog2.pop %v711
        %v734 = vmul.f32 %v733, 0.6931472
        %v735 = vlog2.pop %v712
        %v736 = vmul.f32 %v735, 0.6931472
        %v737 = vlog2.pop %v713
        %v738 = vmul.f32 %v737, 0.6931472
        %v739 = vlog2.pop %v714
        %v740 = vmul.f32 %v739, 0.6931472
        %v741 = vadd.f32 %v637, %v716
        %v742 = vadd.f32 %v638, %v718
        %v743 = vadd.f32 %v639, %v720
        %v744 = vadd.f32 %v640, %v722
        %v745 = vadd.f32 %v641, %v724
        %v746 = vadd.f32 %v642, %v726
        %v747 = vadd.f32 %v643, %v728
        %v748 = vadd.f32 %v644, %v730
        %v749 = vadd.f32 %v645, %v732
        %v750 = vadd.f32 %v646, %v734
        %v751 = vadd.f32 %v647, %v736
        %v752 = vadd.f32 %v648, %v738
        %v753 = vadd.f32 %v649, %v740
        %v754 = vsub.f32 %v624, %v741
        %v755 = vsub.f32 %v625, %v742
        %v756 = vsub.f32 %v626, %v743
        %v757 = vsub.f32 %v627, %v744
        %v758 = vsub.f32 %v628, %v745
        %v759 = vsub.f32 %v629, %v746
        %v760 = vsub.f32 %v630, %v747
        %v761 = vsub.f32 %v631, %v748
        %v762 = vsub.f32 %v632, %v749
        %v763 = vsub.f32 %v633, %v750
        %v764 = vsub.f32 %v634, %v751
        %v765 = vsub.f32 %v635, %v752
        %v766 = vsub.f32 %v636, %v753
        %s767 = smul.u32 %s23, 104
        %v768 = vlaneseq
        %v769 = vshrl.u32 %v768, 7
        %v770 = vadd.s32 %v769, 8
        %v771 = vadd.s32 %v769, 16
        %v772 = vadd.s32 %v769, 24
        %v773 = vadd.s32 %v769, 32
        %v774 = vadd.s32 %v769, 40
        %v775 = vadd.s32 %v769, 48
        %v776 = vadd.s32 %v769, 56
        %v777 = vadd.s32 %v769, 64
        %v778 = vadd.s32 %v769, 72
        %v779 = vadd.s32 %v769, 80
        %v780 = vadd.s32 %v769, 88
        %v781 = vadd.s32 %v769, 96
        %v782 = vstv %s767
        %v783 = vadd.s32 %v782, %v769
        %v784 = vadd.s32 %v782, %v770
        %v785 = vadd.s32 %v782, %v771
        %v786 = vadd.s32 %v782, %v772
        %v787 = vadd.s32 %v782, %v773
        %v788 = vadd.s32 %v782, %v774
        %v789 = vadd.s32 %v782, %v775
        %v790 = vadd.s32 %v782, %v776
        %v791 = vadd.s32 %v782, %v777
        %v792 = vadd.s32 %v782, %v778
        %v793 = vadd.s32 %v782, %v779
        %v794 = vadd.s32 %v782, %v780
        %v795 = vadd.s32 %v782, %v781
        %vm796 = vcmp.lt.s32.totalorder %v783, 200
        %vm797 = vcmp.lt.s32.totalorder %v784, 200
        %vm798 = vcmp.lt.s32.totalorder %v785, 200
        %vm799 = vcmp.lt.s32.totalorder %v786, 200
        %vm800 = vcmp.lt.s32.totalorder %v787, 200
        %vm801 = vcmp.lt.s32.totalorder %v788, 200
        %vm802 = vcmp.lt.s32.totalorder %v789, 200
        %vm803 = vcmp.lt.s32.totalorder %v790, 200
        %vm804 = vcmp.lt.s32.totalorder %v791, 200
        %vm805 = vcmp.lt.s32.totalorder %v792, 200
        %vm806 = vcmp.lt.s32.totalorder %v793, 200
        %vm807 = vcmp.lt.s32.totalorder %v794, 200
        %vm808 = vcmp.lt.s32.totalorder %v795, 200
        %v809 = vand.u32 2147483647, %v754
        %v810 = vand.u32 2147483647, %v755
        %v811 = vand.u32 2147483647, %v756
        %v812 = vand.u32 2147483647, %v757
        %v813 = vand.u32 2147483647, %v758
        %v814 = vand.u32 2147483647, %v759
        %v815 = vand.u32 2147483647, %v760
        %v816 = vand.u32 2147483647, %v761
        %v817 = vand.u32 2147483647, %v762
        %v818 = vand.u32 2147483647, %v763
        %v819 = vand.u32 2147483647, %v764
        %v820 = vand.u32 2147483647, %v765
        %v821 = vand.u32 2147483647, %v766
        %v822 = vsel %vm796, %v809, 0.0
        %v823 = vsel %vm797, %v810, 0.0
        %v824 = vsel %vm798, %v811, 0.0
        %v825 = vsel %vm799, %v812, 0.0
        %v826 = vsel %vm800, %v813, 0.0
        %v827 = vsel %vm801, %v814, 0.0
        %v828 = vsel %vm802, %v815, 0.0
        %v829 = vsel %vm803, %v816, 0.0
        %v830 = vsel %vm804, %v817, 0.0
        %v831 = vsel %vm805, %v818, 0.0
        %v832 = vsel %vm806, %v819, 0.0
        %v833 = vsel %vm807, %v820, 0.0
        %v834 = vsel %vm808, %v821, 0.0
        %vm835 = vcmask 7168
        %v836 = vsel %vm835, %v822, 0.0
        %v837 = vsel %vm835, %v823, 0.0
        %v838 = vadd.f32 %v836, %v837
        %v839 = vsel %vm835, %v824, 0.0
        %v840 = vadd.f32 %v838, %v839
        %v841 = vsel %vm835, %v825, 0.0
        %v842 = vadd.f32 %v840, %v841
        %v843 = vsel %vm835, %v826, 0.0
        %v844 = vadd.f32 %v842, %v843
        %v845 = vsel %vm835, %v827, 0.0
        %v846 = vadd.f32 %v844, %v845
        %v847 = vsel %vm835, %v828, 0.0
        %v848 = vadd.f32 %v846, %v847
        %v849 = vsel %vm835, %v829, 0.0
        %v850 = vadd.f32 %v848, %v849
        %v851 = vsel %vm835, %v830, 0.0
        %v852 = vadd.f32 %v850, %v851
        %v853 = vsel %vm835, %v831, 0.0
        %v854 = vadd.f32 %v852, %v853
        %v855 = vsel %vm835, %v832, 0.0
        %v856 = vadd.f32 %v854, %v855
        %v857 = vsel %vm835, %v833, 0.0
        %v858 = vadd.f32 %v856, %v857
        %v859 = vsel %vm835, %v834, 0.0
        %v860 = vadd.f32 %v858, %v859
        %861 = vadd.xlane.f32.xlu0 %v860
        %v862 = vpop.xlane.xlu0 %861
        %v863 = vrot.slane %v862, 4
        %v864 = vadd.f32 %v862, %v863
        %v865 = vrot.slane %v864, 2
        %v866 = vadd.f32 %v864, %v865
        %v867 = vrot.slane %v866, 1
        %v868 = vadd.f32 %v866, %v867
        %s869 = vtos %v868
        %v870 = vlaneseq
        %v871 = vand.u32 %v870, 127
        %vm872 = vcmp.eq.s32.totalorder %v769, 0
        %vm873 = vcmp.eq.s32.totalorder %v871, 0
        %vm874 = vmand %vm872, %vm873
        %v875 = vstv %s869
        %v876 = vsel %vm874, %v875, 0.0
        %877 = vst [vmem:[%s254] sm:$0xff] %v876
        %s878 = sand.u32 %s104, 1
        %s879 = scalar_lea.sflag [#allocation4], %s878
        %s880 = sand.u32 %s104, 1
        %s881 = smul.addr %s880, 8
        %s882 = scalar_lea.vmem [#allocation8], %s881
        // Predicated region
        $region45: #{tpu_custom_call.1} parent=31 // pred_check
          %p883 = pneg %p114
        $region46: #{tpu_custom_call.1} parent=31 // pred_check_branch
          %885 = sbr.rel (%p883) target = $region48
        $region47: #{tpu_custom_call.1} parent=31 // pred_region
          %s887 = ssub.s32 128, 128
          %888 = vsyncadd %s879, %s887
          %s889 = smul.addr %s23, 128
          %s890 = scalar_lea.hbm %s3, %s889
          %s892 = sshll.u32 %s882, 4
          %s893 = int_to_ptr.vmem [resolvable:$true] %s892
          %895 = dma.vmem_to_hbm [thread:$0]  %s893, 128, %s890, %s879
        $region48: #{tpu_custom_call.1} parent=31 // pred_fallthru
          _
      $region32: #{tpu_custom_call.1} parent=5 // pred_fallthru
        _
      %p896 = scmp.le.s32.totalorder 2, %s18
      // Predicated region
      $region49: #{tpu_custom_call.1} parent=5 // pred_check
        %p897 = pneg %p896
      $region50: #{tpu_custom_call.1} parent=5 // pred_check_branch
        %899 = sbr.rel (%p897) target = $region52
      $region51: #{tpu_custom_call.1} parent=5 // pred_region
        %s900 = ssub.s32 %s18, 2
        // Predicated region
        $region53: #{tpu_custom_call.1} parent=51 // pred_check
          %p901 = pneg %p120
        $region54: #{tpu_custom_call.1} parent=51 // pred_check_branch
          %903 = sbr.rel (%p901) target = $region56
        $region55: #{tpu_custom_call.1} parent=51 // pred_region
          %s904 = sand.u32 %s105, 1
          %s905 = scalar_lea.sflag [#allocation4], %s904
          %s906 = sand.u32 %s105, 1
          %s907 = smul.addr %s906, 8
          %s908 = scalar_lea.vmem [#allocation8], %s907
          %909 = dma.done %s905, 128
        $region56: #{tpu_custom_call.1} parent=51 // pred_fallthru
          _
      $region52: #{tpu_custom_call.1} parent=5 // pred_fallthru
        _
    $region6: #{tpu_custom_call.1} parent=1 // loop_footer
      %s22 = sadd.s32 1, %s18
    $region7: #{tpu_custom_call.1} parent=1 // loop_footer_branch
      %17 = sbr.rel target = $region3
    $region8: #{tpu_custom_call.1} parent=1 // loop_exit
      _
    %910 = vsyncpa [#allocation3], 1
    %s911 = scalar_lea.sflag [#allocation3], 1
    %912 = vsyncpa %s911, 1
    %913 = vsyncpa [#allocation6], 1
    %s914 = scalar_lea.sflag [#allocation6], 1
    %915 = vsyncpa %s914, 1
    %916 = vsyncpa [#allocation4], 1
    %s917 = scalar_lea.sflag [#allocation4], 1
    %918 = vsyncpa %s917, 1

</llo_original>
